<compile_context>
chip_gen: v6e
topology: v6e:2x2x1
jax: 0.10.0
libtpu: 0.0.40
codegen_flags: <defaults>
</compile_context>

<pallas_src>
from functools import partial

import jax
import jax.numpy as jnp
from jax.experimental import pallas as pl
from jax.experimental.pallas import tpu as pltpu


# ---------------------------------------------------------------------------
# Kernel
# ---------------------------------------------------------------------------
def _toxic_head_kernel(x_ref, wa_ref, wm_ref, b_ref, o_ref,
                       sum_ref, max_ref, *, inv_seq_len):
    """Streaming mean/max pool over S tiles; matmul + bias only on the last S step."""
    s = pl.program_id(1)

    @pl.when(s == 0)
    def _init():
        sum_ref[...] = jnp.zeros(sum_ref.shape, sum_ref.dtype)
        max_ref[...] = jnp.full(max_ref.shape, -jnp.inf, max_ref.dtype)

    # f32 accumulators; input stream may be bf16 (the upcast lands in spare
    # VALU slots -- the inner loop is only ~2 VALU ops per loaded vreg).
    x = x_ref[...].astype(jnp.float32)                       # (Bt, St, H)
    sum_ref[...] = sum_ref[...] + jnp.sum(x, axis=1)         # (Bt, H)
    max_ref[...] = jnp.maximum(max_ref[...], jnp.max(x, axis=1))

    @pl.when(s == pl.num_programs(1) - 1)
    def _finalize():
        apool = (sum_ref[...] * inv_seq_len).astype(wa_ref.dtype)   # mean = sum * 1/S
        mpool = max_ref[...].astype(wm_ref.dtype)
        # Split-weight matmuls instead of concat([apool, mpool]) @ W.
        y = jnp.dot(apool, wa_ref[...], preferred_element_type=jnp.float32)
        y = y + jnp.dot(mpool, wm_ref[...], preferred_element_type=jnp.float32)
        y = y + b_ref[...]                                   # (1, OUTp) broadcasts
        o_ref[...] = y.astype(o_ref.dtype)


# ---------------------------------------------------------------------------
# One-time parameter preparation (hoisted out of the per-call wrapper)
# ---------------------------------------------------------------------------
def prepare_head_params(w, b, hidden, *, weight_dtype=jnp.bfloat16):
    """Split + lane-pad + cast the linear params once at model-setup time.

    w: (2H, OUT)  (torch weight (OUT, 2H) transposed);  b: (OUT,).
    Returns (w_a, w_m, b_pad, out_features)."""
    in_f, out_f = w.shape
    assert in_f == 2 * hidden
    out_p = ((out_f + 127) // 128) * 128                     # lane-pad 7 -> 128
    w_pad = jnp.zeros((in_f, out_p), weight_dtype).at[:, :out_f].set(
        w.astype(weight_dtype))
    b_pad = jnp.zeros((1, out_p), jnp.float32).at[0, :out_f].set(
        b.astype(jnp.float32))
    return w_pad[:hidden], w_pad[hidden:], b_pad, out_f


# ---------------------------------------------------------------------------
# Generation-aware tiling / VMEM budget
# ---------------------------------------------------------------------------
def _vmem_budget_bytes():
    # v5e/v6e: 128 MiB VMEM per TC -> ~96 MiB cap; v7x: 64 MiB -> ~48 MiB cap.
    try:
        cap = pltpu.get_tpu_info().vmem_capacity_bytes
    except Exception:
        cap = 64 * 1024 * 1024            # conservative (v7x-sized) fallback
    return min((cap * 3) // 4, 96 * 1024 * 1024)


def _select_tiles(B, S, H, in_itemsize, out_p, w_itemsize, budget):
    """Pick (b_tile, s_tile) maximizing DMA granularity within the VMEM budget."""
    # b_tile: multiple of 8 (sublane) when possible.
    b_tile = 8 if B % 8 == 0 else B

    const_bytes = 2 * H * out_p * w_itemsize + out_p * 4     # single-buffered w_a/w_m + bias

    def vmem_bytes(bt, st):
        return (2 * bt * st * H * in_itemsize                # double-buffered seq_x block
                + 2 * bt * out_p * 4                         # double-buffered output block
                + 2 * bt * H * 4                             # f32 sum/max scratch
                + const_bytes)

    # s_tile: the largest divisor of S that is sublane friendly (16 for 2-byte
    # dtypes, 8 otherwise, or full S) and fits double-buffered.  Big tiles ==
    # big DMAs == higher fraction of the HBM roofline.
    sub = 16 if in_itemsize < 4 else 8
    divs = [d for d in range(1, S + 1) if S % d == 0]
    cands = [d for d in divs if d == S or d % sub == 0]
    if not cands:
        cands = [d for d in divs if d == S or d % 8 == 0]
    if not cands:
        cands = [S]
    s_tile = None
    for d in sorted(cands, reverse=True):
        if vmem_bytes(b_tile, d) <= budget:
            s_tile = d
            break
    if s_tile is None:
        s_tile = min(cands)

    # With spare VMEM (v5e/v6e) grow the batch tile, but always keep >= 2
    # B-tiles so the "parallel" axis can shard across both v7x TensorCores.
    while (B % (2 * b_tile) == 0 and B // (2 * b_tile) >= 2
           and vmem_bytes(2 * b_tile, s_tile) <= budget):
        b_tile *= 2

    return b_tile, s_tile


# ---------------------------------------------------------------------------
# Head wrapper
# ---------------------------------------------------------------------------
def toxic_head(seq_x, w_a, w_m, b_pad, out_features, *, b_tile=None, s_tile=None,
               vmem_limit_bytes=None):
    """seq_x: (B, S, H); w_a/w_m: (H, OUTp) mean/max halves; b_pad: (1, OUTp)."""
    B, S, H = seq_x.shape
    assert w_a.shape == w_m.shape and w_a.shape[0] == H
    out_p = w_a.shape[1]
    assert out_p % 128 == 0 and out_features <= out_p

    if vmem_limit_bytes is None:
        vmem_limit_bytes = _vmem_budget_bytes()
    in_itemsize = jnp.dtype(seq_x.dtype).itemsize
    w_itemsize = jnp.dtype(w_a.dtype).itemsize
    auto_b, auto_s = _select_tiles(B, S, H, in_itemsize, out_p, w_itemsize,
                                   int(0.85 * vmem_limit_bytes))
    b_tile = auto_b if b_tile is None else b_tile
    s_tile = auto_s if s_tile is None else s_tile
    assert B % b_tile == 0 and (b_tile % 8 == 0 or b_tile == B)
    assert S % s_tile == 0 and (s_tile % 8 == 0 or s_tile == S)

    grid = (B // b_tile, S // s_tile)
    cost = pl.CostEstimate(
        flops=2 * B * 2 * H * out_p + 2 * B * S * H,
        transcendentals=0,
        bytes_accessed=(B * S * H * in_itemsize + 2 * H * out_p * w_itemsize
                        + out_p * 4 + B * out_p * 4),
    )

    out_padded = pl.pallas_call(
        partial(_toxic_head_kernel, inv_seq_len=1.0 / S),
        out_shape=jax.ShapeDtypeStruct((B, out_p), jnp.float32),
        grid_spec=pltpu.PrefetchScalarGridSpec(
            num_scalar_prefetch=0,
            grid=grid,
            in_specs=[
                # The only stream that matters: double-buffered by default.
                pl.BlockSpec((b_tile, s_tile, H), lambda i, s: (i, s, 0)),
                # Constant operands: DMA'd once, single-buffered to save VMEM.
                pl.BlockSpec((H, out_p), lambda i, s: (0, 0),
                             pipeline_mode=pl.Buffered(1)),
                pl.BlockSpec((H, out_p), lambda i, s: (0, 0),
                             pipeline_mode=pl.Buffered(1)),
                pl.BlockSpec((1, out_p), lambda i, s: (0, 0),
                             pipeline_mode=pl.Buffered(1)),
            ],
            out_specs=pl.BlockSpec((b_tile, out_p), lambda i, s: (i, 0)),
            scratch_shapes=[
                pltpu.VMEM((b_tile, H), jnp.float32),   # running sum
                pltpu.VMEM((b_tile, H), jnp.float32),   # running max
            ],
        ),
        compiler_params=pltpu.CompilerParams(
            dimension_semantics=("parallel", "arbitrary"),
            vmem_limit_bytes=vmem_limit_bytes,
        ),
        cost_estimate=cost,
    )(seq_x, w_a, w_m, b_pad)

    return out_padded[:, :out_features]


# ---------------------------------------------------------------------------
# Full module forward (backbone stand-in + head)
# ---------------------------------------------------------------------------
def forward(input_ids, attention_masks, emb_table, head_params):
    """Module forward with a synthetic embedding backbone stand-in."""
    # TODO(synk): XLMModel.from_pretrained('xlm-mlm-tlm-xnli15-1024') has no
    # Pallas equivalent; the stand-in is a deterministic embedding lookup. In
    # a real deployment this head should be fused onto the backbone's
    # last-layer output tiles (or the gather fused via scalar prefetch) to
    # avoid the seq_x HBM round trip. attention_mask is only consumed by the
    # real backbone; the torch module pools unmasked, so it is unused here.
    del attention_masks
    w_a, w_m, b_pad, out_f = head_params
    seq_x = jnp.take(emb_table, input_ids, axis=0)            # (B, S, H)
    # Stream seq_x in bf16: halves HBM bytes on the one stream that matters;
    # the kernel's f32 accumulators preserve numerics.
    seq_x = seq_x.astype(jnp.bfloat16)
    # TODO(synk): nn.Dropout(0.3) is identity at inference; training-mode
    # stochastic masking (pltpu.prng_*) is not implemented.
    return toxic_head(seq_x, w_a, w_m, b_pad, out_f)


if __name__ == "__main__":
    key = jax.random.PRNGKey(0)
    B, S, H, VOCAB = 2, 16, 32, 64          # small stand-in for hidden=1024, seq=512
    AUX = 5
    OUT = 2 + AUX                            # = 7
    IN_FEATURES = 2 * H                      # = backbone.ffns[11].lin2.out_features * 2

    k_ids, k_emb, k_w, k_b = jax.random.split(key, 4)

    input_ids = jax.random.randint(k_ids, (B, S), 0, VOCAB, dtype=jnp.int32)
    attention_masks = jnp.ones((B, S), dtype=jnp.int32)

    emb_table = jax.random.normal(k_emb, (VOCAB, H), dtype=jnp.float32)
    bound = 1.0 / (IN_FEATURES ** 0.5)       # PyTorch nn.Linear default init range
    # Stored as (in_features, out_features) == torch weight (OUT, 2H) transposed.
    w = jax.random.uniform(k_w, (IN_FEATURES, OUT), minval=-bound, maxval=bound,
                           dtype=jnp.float32)
    b = jax.random.uniform(k_b, (OUT,), minval=-bound, maxval=bound,
                           dtype=jnp.float32)

    # One-time parameter prep (split / lane-pad / bf16 cast), hoisted out of
    # the per-call path.
    head_params = prepare_head_params(w, b, H, weight_dtype=jnp.bfloat16)

    out = forward(input_ids, attention_masks, emb_table, head_params)
    out = jax.block_until_ready(out)
    assert out.shape == (B, OUT) and out.dtype == jnp.float32

    # Reference #1: mirror the kernel math exactly (bf16 stream + bf16 weights,
    # f32 accumulation) -- tight tolerance.
    w_a, w_m, b_pad, _ = head_params
    seq_bf = jnp.take(emb_table, input_ids, axis=0).astype(jnp.bfloat16)
    seq_f32 = seq_bf.astype(jnp.float32)
    apool = jnp.sum(seq_f32, axis=1) * (1.0 / S)
    mpool = jnp.max(seq_f32, axis=1)
    ref_mirror = (
        jnp.dot(apool.astype(jnp.bfloat16), w_a, preferred_element_type=jnp.float32)
        + jnp.dot(mpool.astype(jnp.bfloat16), w_m, preferred_element_type=jnp.float32)
        + b_pad
    )[:, :OUT]
    assert jnp.allclose(out, ref_mirror, atol=1e-4, rtol=1e-4), \
        "Pallas head mismatch vs mirrored (bf16) reference"

    # Reference #2: the original f32 module math (mean/max pool + concat +
    # linear); loose tolerance accounts for the intentional bf16 streaming.
    seq_ref = jnp.take(emb_table, input_ids, axis=0)
    ref = jnp.concatenate(
        [jnp.mean(seq_ref, axis=1), jnp.max(seq_ref, axis=1)], axis=1) @ w + b
    assert jnp.allclose(out, ref, atol=5e-2, rtol=5e-2), \
        "Pallas head mismatch vs f32 module reference"

    print("KERNEL_OK")
</pallas_src>

<mosaic_0001>
module attributes {stable_mosaic.version = 11 : i64} {
  func.func @_toxic_head_kernel(%arg0: i32, %arg1: i32, %arg2: memref<2x16x32xbf16, #tpu.memory_space<vmem>>, %arg3: memref<32x128xbf16, #tpu.memory_space<vmem>>, %arg4: memref<32x128xbf16, #tpu.memory_space<vmem>>, %arg5: memref<1x128xf32, #tpu.memory_space<vmem>>, %arg6: memref<2x128xf32, #tpu.memory_space<vmem>>, %arg7: memref<2x32xf32, #tpu.memory_space<vmem>>, %arg8: memref<2x32xf32, #tpu.memory_space<vmem>>) attributes {dimension_semantics = [#tpu.dimension_semantics<parallel>, #tpu.dimension_semantics<arbitrary>], iteration_bounds = array<i64: 1, 1>, scalar_prefetch = 0 : i64, scratch_operands = 2 : i64, tpu.core_type = #tpu.core_type<tc>, window_params = [{transform_indices = @transform_0, window_bounds = array<i64: 2, 16, 32>}, {pipeline_mode = #tpu.pipeline_mode<synchronous>, transform_indices = @transform_1, window_bounds = array<i64: 32, 128>}, {pipeline_mode = #tpu.pipeline_mode<synchronous>, transform_indices = @transform_2, window_bounds = array<i64: 32, 128>}, {pipeline_mode = #tpu.pipeline_mode<synchronous>, transform_indices = @transform_3, window_bounds = array<i64: 1, 128>}, {transform_indices = @transform_4, window_bounds = array<i64: 2, 128>}]} {
    %c0_i32 = arith.constant 0 : i32
    %0 = arith.cmpi eq, %arg1, %c0_i32 : i32
    %1 = arith.extui %0 : i1 to i32
    %c0_i32_0 = arith.constant 0 : i32
    %2 = arith.cmpi ne, %1, %c0_i32_0 : i32
    scf.if %2 {
      %cst_14 = arith.constant 0.000000e+00 : f32
      %16 = vector.broadcast %cst_14 : f32 to vector<2x32xf32>
      %c0_15 = arith.constant 0 : index
      %c0_16 = arith.constant 0 : index
      %17 = vector.load %arg7[%c0_15, %c0_16] : memref<2x32xf32, #tpu.memory_space<vmem>>, vector<2x32xf32>
      tpu.vector_store %arg7[%c0_15, %c0_16], %16 {strides = array<i32>} : memref<2x32xf32, #tpu.memory_space<vmem>>, vector<2x32xf32>,
      %cst_17 = arith.constant 0xFF800000 : f32
      %18 = vector.broadcast %cst_17 : f32 to vector<2x32xf32>
      %c0_18 = arith.constant 0 : index
      %c0_19 = arith.constant 0 : index
      %19 = vector.load %arg8[%c0_18, %c0_19] : memref<2x32xf32, #tpu.memory_space<vmem>>, vector<2x32xf32>
      tpu.vector_store %arg8[%c0_18, %c0_19], %18 {strides = array<i32>} : memref<2x32xf32, #tpu.memory_space<vmem>>, vector<2x32xf32>,
    } else {
    }
    %c0 = arith.constant 0 : index
    %c0_1 = arith.constant 0 : index
    %c0_2 = arith.constant 0 : index
    %3 = vector.load %arg2[%c0, %c0_1, %c0_2] : memref<2x16x32xbf16, #tpu.memory_space<vmem>>, vector<2x16x32xbf16>
    %4 = arith.extf %3 : vector<2x16x32xbf16> to vector<2x16x32xf32>
    %c0_3 = arith.constant 0 : index
    %c0_4 = arith.constant 0 : index
    %5 = vector.load %arg7[%c0_3, %c0_4] : memref<2x32xf32, #tpu.memory_space<vmem>>, vector<2x32xf32>
    %cst = arith.constant dense<0.000000e+00> : vector<2x32xf32>
    %6 = vector.multi_reduction <add>, %4, %cst [1] : vector<2x16x32xf32> to vector<2x32xf32>
    %7 = arith.addf %5, %6 : vector<2x32xf32>
    %c0_5 = arith.constant 0 : index
    %c0_6 = arith.constant 0 : index
    %8 = vector.load %arg7[%c0_5, %c0_6] : memref<2x32xf32, #tpu.memory_space<vmem>>, vector<2x32xf32>
    tpu.vector_store %arg7[%c0_5, %c0_6], %7 {strides = array<i32>} : memref<2x32xf32, #tpu.memory_space<vmem>>, vector<2x32xf32>,
    %c0_7 = arith.constant 0 : index
    %c0_8 = arith.constant 0 : index
    %9 = vector.load %arg8[%c0_7, %c0_8] : memref<2x32xf32, #tpu.memory_space<vmem>>, vector<2x32xf32>
    %cst_9 = arith.constant dense<0xFF800000> : vector<2x32xf32>
    %10 = vector.multi_reduction <maximumf>, %4, %cst_9 [1] : vector<2x16x32xf32> to vector<2x32xf32>
    %11 = arith.maximumf %9, %10 : vector<2x32xf32>
    %c0_10 = arith.constant 0 : index
    %c0_11 = arith.constant 0 : index
    %12 = vector.load %arg8[%c0_10, %c0_11] : memref<2x32xf32, #tpu.memory_space<vmem>>, vector<2x32xf32>
    tpu.vector_store %arg8[%c0_10, %c0_11], %11 {strides = array<i32>} : memref<2x32xf32, #tpu.memory_space<vmem>>, vector<2x32xf32>,
    %c0_i32_12 = arith.constant 0 : i32
    %13 = arith.cmpi eq, %arg1, %c0_i32_12 : i32
    %14 = arith.extui %13 : i1 to i32
    %c0_i32_13 = arith.constant 0 : i32
    %15 = arith.cmpi ne, %14, %c0_i32_13 : i32
    scf.if %15 {
      %c0_14 = arith.constant 0 : index
      %c0_15 = arith.constant 0 : index
      %16 = vector.load %arg7[%c0_14, %c0_15] : memref<2x32xf32, #tpu.memory_space<vmem>>, vector<2x32xf32>
      %cst_16 = arith.constant 6.250000e-02 : f32
      %17 = vector.broadcast %cst_16 : f32 to vector<2x32xf32>
      %18 = arith.mulf %16, %17 : vector<2x32xf32>
      %19 = arith.truncf %18 : vector<2x32xf32> to vector<2x32xbf16>
      %c0_17 = arith.constant 0 : index
      %c0_18 = arith.constant 0 : index
      %20 = vector.load %arg8[%c0_17, %c0_18] : memref<2x32xf32, #tpu.memory_space<vmem>>, vector<2x32xf32>
      %21 = arith.truncf %20 : vector<2x32xf32> to vector<2x32xbf16>
      %c0_19 = arith.constant 0 : index
      %c0_20 = arith.constant 0 : index
      %22 = vector.load %arg3[%c0_19, %c0_20] : memref<32x128xbf16, #tpu.memory_space<vmem>>, vector<32x128xbf16>
      %cst_21 = arith.constant dense<0.000000e+00> : vector<2x128xf32>
      %23 = tpu.matmul %19, %22, %cst_21 {dimension_numbers = #tpu.dot_dimension_numbers<[1], [0], [0], [1], [0, 0, 1, 1], [], []>} : vector<2x32xbf16>, vector<32x128xbf16>, vector<2x128xf32> -> vector<2x128xf32>
      %c0_22 = arith.constant 0 : index
      %c0_23 = arith.constant 0 : index
      %24 = vector.load %arg4[%c0_22, %c0_23] : memref<32x128xbf16, #tpu.memory_space<vmem>>, vector<32x128xbf16>
      %cst_24 = arith.constant dense<0.000000e+00> : vector<2x128xf32>
      %25 = tpu.matmul %21, %24, %cst_24 {dimension_numbers = #tpu.dot_dimension_numbers<[1], [0], [0], [1], [0, 0, 1, 1], [], []>} : vector<2x32xbf16>, vector<32x128xbf16>, vector<2x128xf32> -> vector<2x128xf32>
      %26 = arith.addf %23, %25 : vector<2x128xf32>
      %c0_25 = arith.constant 0 : index
      %c0_26 = arith.constant 0 : index
      %27 = vector.load %arg5[%c0_25, %c0_26] : memref<1x128xf32, #tpu.memory_space<vmem>>, vector<1x128xf32>
      %28 = vector.broadcast %27 : vector<1x128xf32> to vector<2x128xf32>
      %29 = arith.addf %26, %28 : vector<2x128xf32>
      %c0_27 = arith.constant 0 : index
      %c0_28 = arith.constant 0 : index
      %30 = vector.load %arg6[%c0_27, %c0_28] : memref<2x128xf32, #tpu.memory_space<vmem>>, vector<2x128xf32>
      tpu.vector_store %arg6[%c0_27, %c0_28], %29 {strides = array<i32>} : memref<2x128xf32, #tpu.memory_space<vmem>>, vector<2x128xf32>,
    } else {
    }
    return
  }
  func.func @transform_0(%arg0: i32, %arg1: i32) -> (i32, i32, i32) {
    %c0_i32 = arith.constant 0 : i32
    %c0_i32_0 = arith.constant 0 : i32
    return %arg0, %arg1, %c0_i32 : i32, i32, i32
  }
  func.func @transform_1(%arg0: i32, %arg1: i32) -> (i32, i32) {
    %c0_i32 = arith.constant 0 : i32
    %c0_i32_0 = arith.constant 0 : i32
    %c0_i32_1 = arith.constant 0 : i32
    return %c0_i32, %c0_i32_0 : i32, i32
  }
  func.func @transform_2(%arg0: i32, %arg1: i32) -> (i32, i32) {
    %c0_i32 = arith.constant 0 : i32
    %c0_i32_0 = arith.constant 0 : i32
    %c0_i32_1 = arith.constant 0 : i32
    return %c0_i32, %c0_i32_0 : i32, i32
  }
  func.func @transform_3(%arg0: i32, %arg1: i32) -> (i32, i32) {
    %c0_i32 = arith.constant 0 : i32
    %c0_i32_0 = arith.constant 0 : i32
    %c0_i32_1 = arith.constant 0 : i32
    return %c0_i32, %c0_i32_0 : i32, i32
  }
  func.func @transform_4(%arg0: i32, %arg1: i32) -> (i32, i32) {
    %c0_i32 = arith.constant 0 : i32
    %c0_i32_0 = arith.constant 0 : i32
    return %arg0, %c0_i32 : i32, i32
  }
}

</mosaic_0001>

<llo_original>
// kernel: tpu_custom_call.1
$region0: #{tpu_custom_call.1}
  #allocation0 [shape = 'u32[]', space=smem, size = 0x4, offset = 0x4, fixed_abs, tag = 'smem constant byte address 0x4 - core index']
  #allocation1 [shape = 'u32[144,128]{1,0:T(1,128)}', space=vmem, size = 0x12000, scoped, tag = 'internal scratch']
  #allocation2 [shape = 'f32[2,32]{1,0:T(2,128)}', space=vmem, size = 0x400, scoped, tag = 'scratch operand']
  #allocation3 [shape = 'f32[2,32]{1,0:T(2,128)}', space=vmem, size = 0x400, scoped, tag = 'scratch operand']
  %s0 = inlined_call_operand.hbm [shape: bf16[2,16,32], index: 0, kind: input, shape index: {}]
  %s1 = inlined_call_operand.hbm [shape: bf16[32,128], index: 1, kind: input, shape index: {}]
  %s2 = inlined_call_operand.hbm [shape: bf16[32,128], index: 2, kind: input, shape index: {}]
  %s3 = inlined_call_operand.vmem [shape: f32[1,128], index: 3, kind: input, shape index: {}]
  %s4 = inlined_call_operand.hbm [shape: f32[2,128], index: 4, kind: output, shape index: {}]
  %s5 = sld [smem:[#allocation0]]
  $region46: #{tpu_custom_call.1} parent=0
    _
  %s7 = ssub.s32 1, %s5
  %s8 = scalar_select 0, %s7, %s5
  $region1: #{tpu_custom_call.1} parent=0
    #allocation4 [shape = 'u8[8192]{0}', space=vmem, size = 0x2000, scoped, tag = 'input window, operand 0, single buffered']
    #allocation5 [shape = 's32[1]{0}', space=sflag, size = 0x4, scoped, tag = 'scoped memory for tpu_custom_call.1']
    #allocation6 [shape = 's32[1]{0}', space=sflag, size = 0x4, scoped, tag = 'scoped memory for tpu_custom_call.1']
    #allocation7 [shape = 'u8[8192]{0}', space=vmem, size = 0x2000, scoped, tag = 'input window, operand 1, single buffered']
    #allocation8 [shape = 's32[1]{0}', space=sflag, size = 0x4, scoped, tag = 'scoped memory for tpu_custom_call.1']
    #allocation9 [shape = 'u8[8192]{0}', space=vmem, size = 0x2000, scoped, tag = 'input window, operand 2, single buffered']
    #allocation10 [shape = 'u8[1024]{0}', space=vmem, size = 0x400, scoped, tag = 'output window, operand 0, single buffered']
    %9 = vsyncpa [#allocation5], 0
    %10 = vsyncpa [#allocation8], 0
    %11 = vsyncpa [#allocation6], 0
    // Predicated region
    $region2: #{tpu_custom_call.1} parent=1 // pred_check
      _
    $region3: #{tpu_custom_call.1} parent=1 // pred_check_branch
      %13 = sbr.rel (0) target = $region5
    $region4: #{tpu_custom_call.1} parent=1 // pred_region
      %s15 = ssub.s32 256, 256
      %16 = vsyncadd [#allocation5], %s15
      %s17 = sshll.u32 [#allocation4], 4
      %s18 = int_to_ptr.vmem [resolvable:$true] %s17
      %23 = dma.hbm_to_vmem [thread:$0]  %s0, 256, %s18, [#allocation5], 64, 64, 4
    $region5: #{tpu_custom_call.1} parent=1 // pred_fallthru
      _
    // Predicated region
    $region6: #{tpu_custom_call.1} parent=1 // pred_check
      _
    $region7: #{tpu_custom_call.1} parent=1 // pred_check_branch
      %25 = sbr.rel (0) target = $region9
    $region8: #{tpu_custom_call.1} parent=1 // pred_region
      %s27 = ssub.s32 256, 256
      %28 = vsyncadd [#allocation8], %s27
      %s29 = sshll.u32 [#allocation7], 4
      %s30 = int_to_ptr.vmem [resolvable:$true] %s29
      %35 = dma.hbm_to_vmem [thread:$0]  %s1, 256, %s30, [#allocation8], 64, 64, 4
    $region9: #{tpu_custom_call.1} parent=1 // pred_fallthru
      _
    // Predicated region
    $region10: #{tpu_custom_call.1} parent=1 // pred_check
      _
    $region11: #{tpu_custom_call.1} parent=1 // pred_check_branch
      %37 = sbr.rel (0) target = $region13
    $region12: #{tpu_custom_call.1} parent=1 // pred_region
      %s39 = ssub.s32 256, 256
      %40 = vsyncadd [#allocation8], %s39
      %s41 = sshll.u32 [#allocation9], 4
      %s42 = int_to_ptr.vmem [resolvable:$true] %s41
      %47 = dma.hbm_to_vmem [thread:$0]  %s2, 256, %s42, [#allocation8], 64, 64, 4
    $region13: #{tpu_custom_call.1} parent=1 // pred_fallthru
      _
    // Predicated region
    $region14: #{tpu_custom_call.1} parent=1 // pred_check
      _
    $region15: #{tpu_custom_call.1} parent=1 // pred_check_branch
      %49 = sbr.rel (0) target = $region17
    $region16: #{tpu_custom_call.1} parent=1 // pred_region
      _
    $region17: #{tpu_custom_call.1} parent=1 // pred_fallthru
      _
    // Predicated region
    $region18: #{tpu_custom_call.1} parent=1 // pred_check
      _
    $region19: #{tpu_custom_call.1} parent=1 // pred_check_branch
      %51 = sbr.rel (0) target = $region21
    $region20: #{tpu_custom_call.1} parent=1 // pred_region
      %52 = dma.done [#allocation5], 256
    $region21: #{tpu_custom_call.1} parent=1 // pred_fallthru
      _
    // Predicated region
    $region22: #{tpu_custom_call.1} parent=1 // pred_check
      _
    $region23: #{tpu_custom_call.1} parent=1 // pred_check_branch
      %54 = sbr.rel (0) target = $region25
    $region24: #{tpu_custom_call.1} parent=1 // pred_region
      %55 = dma.done [#allocation8], 256
    $region25: #{tpu_custom_call.1} parent=1 // pred_fallthru
      _
    // Predicated region
    $region26: #{tpu_custom_call.1} parent=1 // pred_check
      _
    $region27: #{tpu_custom_call.1} parent=1 // pred_check_branch
      %57 = sbr.rel (0) target = $region29
    $region28: #{tpu_custom_call.1} parent=1 // pred_region
      %58 = dma.done [#allocation8], 256
    $region29: #{tpu_custom_call.1} parent=1 // pred_fallthru
      _
    %p60 = scmp.eq.s32.totalorder 0, 0
    // Predicated region
    $region30: #{tpu_custom_call.1} parent=1 // pred_check
      %p61 = pneg %p60
    $region31: #{tpu_custom_call.1} parent=1 // pred_check_branch
      %63 = sbr.rel (%p61) target = $region33
    $region32: #{tpu_custom_call.1} parent=1 // pred_region
      %vm64 = vcmask 254976
      %65 = vst.msk [vmem:[#allocation2] sm:$0x3] %vm64, 0.0
      %66 = vst.msk [vmem:[#allocation3] sm:$0x3] %vm64, -inf
    $region33: #{tpu_custom_call.1} parent=1 // pred_fallthru
      _
    %v67 = vld [vmem:[#allocation4] sm:$0xf]
    %v68 = vld [vmem:[#allocation4 + $0x4] sm:$0xf]
    %v69 = vld [vmem:[#allocation4 + $0x8] sm:$0xf]
    %v70 = vld [vmem:[#allocation4 + $0xc] sm:$0xf]
    %v71 = vunpack.c.l.bf16 %v67
    %v72 = vunpack.c.l.bf16 %v68
    %v73 = vunpack.c.l.bf16 %v69
    %v74 = vunpack.c.l.bf16 %v70
    %v75 = vld [vmem:[#allocation2] sm:$0x3]
    %vm76 = vcmask 261120
    %v77 = vsel %vm76, %v71, 0.0
    %v78 = vsel %vm76, %v72, 0.0
    %v79 = vadd.f32 %v77, %v78
    %v80 = vrot.slane %v79, 4
    %v81 = vadd.f32 %v79, %v80
    %v82 = vrot.slane %v81, 2
    %v83 = vadd.f32 %v81, %v82
    %v84 = vrot.slane %v83, 1
    %v85 = vadd.f32 %v83, %v84
    %v86 = vsel %vm76, %v73, 0.0
    %v87 = vsel %vm76, %v74, 0.0
    %v88 = vadd.f32 %v86, %v87
    %v89 = vrot.slane %v88, 4
    %v90 = vadd.f32 %v88, %v89
    %v91 = vrot.slane %v90, 2
    %v92 = vadd.f32 %v90, %v91
    %v93 = vrot.slane %v92, 1
    %v94 = vadd.f32 %v92, %v93
    %vm97 = vcmask 1041409
    %v98 = vsel %vm97, %v94, %v85
    %v100 = vadd.f32 %v75, %v98
    %vm101 = vcmask 254976
    %102 = vst.msk [vmem:[#allocation2] sm:$0x3] %vm101, %v100
    %v103 = vld [vmem:[#allocation3] sm:$0x3]
    %v104 = vsel %vm76, %v71, -inf
    %v105 = vsel %vm76, %v72, -inf
    %v106 = vmax.f32 %v104, %v105
    %v107 = vrot.slane %v106, 4
    %v108 = vmax.f32 %v106, %v107
    %v109 = vrot.slane %v108, 2
    %v110 = vmax.f32 %v108, %v109
    %v111 = vrot.slane %v110, 1
    %v112 = vmax.f32 %v110, %v111
    %v113 = vsel %vm76, %v73, -inf
    %v114 = vsel %vm76, %v74, -inf
    %v115 = vmax.f32 %v113, %v114
    %v116 = vrot.slane %v115, 4
    %v117 = vmax.f32 %v115, %v116
    %v118 = vrot.slane %v117, 2
    %v119 = vmax.f32 %v117, %v118
    %v120 = vrot.slane %v119, 1
    %v121 = vmax.f32 %v119, %v120
    %v124 = vsel %vm97, %v121, %v112
    %v126 = vmax.f32 %v103, %v124
    %127 = vst.msk [vmem:[#allocation3] sm:$0x3] %vm101, %v126
    // Predicated region
    $region34: #{tpu_custom_call.1} parent=1 // pred_check
      %p128 = pneg %p60
    $region35: #{tpu_custom_call.1} parent=1 // pred_check_branch
      %130 = sbr.rel (%p128) target = $region37
    $region36: #{tpu_custom_call.1} parent=1 // pred_region
      %v131 = vld [vmem:[#allocation2] sm:$0x3]
      %v132 = vmul.f32 %v131, 0.0625
      %v133 = vpack.c.bf16 %v132, %v132
      %v134 = vld [vmem:[#allocation3] sm:$0x3]
      %v135 = vpack.c.bf16 %v134, %v134
      %v136 = vld [vmem:[#allocation7] sm:$0xf]
      %v137 = vld [vmem:[#allocation7 + $0x4] sm:$0xf]
      %v138 = vld [vmem:[#allocation7 + $0x8] sm:$0xf]
      %v139 = vld [vmem:[#allocation7 + $0xc] sm:$0xf]
      %v140 = vld [vmem:[#allocation9] sm:$0xf]
      %v141 = vld [vmem:[#allocation9 + $0x4] sm:$0xf]
      %v142 = vld [vmem:[#allocation9 + $0x8] sm:$0xf]
      %v143 = vld [vmem:[#allocation9 + $0xc] sm:$0xf]
      %v148 = vunpack.c.l.b16 %v140
      %v149 = vunpack.c.l.b16 %v141
      %v150 = vunpack.c.l.b16 %v142
      %v151 = vunpack.c.l.b16 %v143
      %v152 = vpack.c.b16 %v149, %v148
      %v153 = vpack.c.b16 %v151, %v150
      %v157 = vsel %vm76, %v135, 0
      %159 = vmatprep.subr.bf16.mxu0 0
      %160 = vmatpush1.bf16.msra.mxu0 0
      %161 = vmatprep.subr.bf16.mxu0 0
      %162 = vmatpush1.bf16.msra.mxu0 0
      %163 = vmatprep.subr.bf16.mxu0 0
      %164 = vmatpush1.bf16.msra.mxu0 0
      %165 = vmatprep.subr.bf16.mxu0 0
      %166 = vmatpush1.bf16.msra.mxu0 0
      %167 = vmatprep.subr.bf16.mxu0 0
      %168 = vmatpush1.bf16.msra.mxu0 0
      %169 = vmatprep.subr.bf16.mxu0 0
      %170 = vmatpush1.bf16.msra.mxu0 0
      %171 = vmatprep.subr.bf16.mxu0 0
      %172 = vmatpush1.bf16.msra.mxu0 %v153
      %173 = vmatprep.subr.bf16.mxu0 0
      %174 = vmatpush1.bf16.msra.mxu0 %v152
      %175 = vmatprep.subr.bf16.mxu0 0
      %176 = vmatpush2.bf16.msra.mxu0 0
      %177 = vmatprep.subr.bf16.mxu0 0
      %178 = vmatpush2.bf16.msra.mxu0 0
      %179 = vmatprep.subr.bf16.mxu0 0
      %180 = vmatpush2.bf16.msra.mxu0 0
      %181 = vmatprep.subr.bf16.mxu0 0
      %182 = vmatpush2.bf16.msra.mxu0 0
      %183 = vmatprep.subr.bf16.mxu0 0
      %184 = vmatpush2.bf16.msra.mxu0 0
      %185 = vmatprep.subr.bf16.mxu0 0
      %186 = vmatpush2.bf16.msra.mxu0 0
      %187 = vmatprep.subr.bf16.mxu0 0
      %188 = vmatpush2.bf16.msra.mxu0 0
      %189 = vmatprep.subr.bf16.mxu0 0
      %190 = vmatpush2.bf16.msra.mxu0 0
      %191 = vmatprep.mubr.bf16.mxu0 0
      %192 = vmatmul.mubr.bf16.gmra.mxu0 %v157
      %v193 = vpop.f32.mrf.mxu0
      %v194 = vadd.f32 0.0, %v193
      %v195 = vpop.f32.mrf.mxu0
      %v196 = vpop.f32.mrf.mxu0
      %v197 = vpop.f32.mrf.mxu0
      %198 = vdwg.mxu0
      %v203 = vunpack.c.l.b16 %v136
      %v204 = vunpack.c.l.b16 %v137
      %v205 = vunpack.c.l.b16 %v138
      %v206 = vunpack.c.l.b16 %v139
      %v207 = vpack.c.b16 %v204, %v203
      %v208 = vpack.c.b16 %v206, %v205
      %v212 = vsel %vm76, %v133, 0
      %214 = vmatprep.subr.bf16.mxu0 0
      %215 = vmatpush1.bf16.msra.mxu0 0
      %216 = vmatprep.subr.bf16.mxu0 0
      %217 = vmatpush1.bf16.msra.mxu0 0
      %218 = vmatprep.subr.bf16.mxu0 0
      %219 = vmatpush1.bf16.msra.mxu0 0
      %220 = vmatprep.subr.bf16.mxu0 0
      %221 = vmatpush1.bf16.msra.mxu0 0
      %222 = vmatprep.subr.bf16.mxu0 0
      %223 = vmatpush1.bf16.msra.mxu0 0
      %224 = vmatprep.subr.bf16.mxu0 0
      %225 = vmatpush1.bf16.msra.mxu0 0
      %226 = vmatprep.subr.bf16.mxu0 0
      %227 = vmatpush1.bf16.msra.mxu0 %v208
      %228 = vmatprep.subr.bf16.mxu0 0
      %229 = vmatpush1.bf16.msra.mxu0 %v207
      %230 = vmatprep.subr.bf16.mxu0 0
      %231 = vmatpush2.bf16.msra.mxu0 0
      %232 = vmatprep.subr.bf16.mxu0 0
      %233 = vmatpush2.bf16.msra.mxu0 0
      %234 = vmatprep.subr.bf16.mxu0 0
      %235 = vmatpush2.bf16.msra.mxu0 0
      %236 = vmatprep.subr.bf16.mxu0 0
      %237 = vmatpush2.bf16.msra.mxu0 0
      %238 = vmatprep.subr.bf16.mxu0 0
      %239 = vmatpush2.bf16.msra.mxu0 0
      %240 = vmatprep.subr.bf16.mxu0 0
      %241 = vmatpush2.bf16.msra.mxu0 0
      %242 = vmatprep.subr.bf16.mxu0 0
      %243 = vmatpush2.bf16.msra.mxu0 0
      %244 = vmatprep.subr.bf16.mxu0 0
      %245 = vmatpush2.bf16.msra.mxu0 0
      %246 = vmatprep.mubr.bf16.mxu0 0
      %247 = vmatmul.mubr.bf16.gmra.mxu0 %v212
      %v248 = vpop.f32.mrf.mxu0
      %v249 = vadd.f32 %v194, %v248
      %v250 = vpop.f32.mrf.mxu0
      %v251 = vpop.f32.mrf.mxu0
      %v252 = vpop.f32.mrf.mxu0
      %253 = vdwg.mxu0
      %v254 = vld [vmem:[%s3] sm:$0x1]
      %v256 = vlaneseq
      %v257 = vshrl.u32 %v256, 7
      %v258 = vsub.s32 0, %v257
      %v259 = vrot.slane %v254, %v258
      %v261 = vadd.f32 %v249, %v259
      %262 = vst [vmem:[#allocation10] sm:$0x3] %v261
    $region37: #{tpu_custom_call.1} parent=1 // pred_fallthru
      _
    // Predicated region
    $region38: #{tpu_custom_call.1} parent=1 // pred_check
      _
    $region39: #{tpu_custom_call.1} parent=1 // pred_check_branch
      %264 = sbr.rel (0) target = $region41
    $region40: #{tpu_custom_call.1} parent=1 // pred_region
      %s266 = ssub.s32 32, 32
      %267 = vsyncadd [#allocation6], %s266
      %s269 = sshll.u32 [#allocation10], 4
      %s270 = int_to_ptr.vmem [resolvable:$true] %s269
      %272 = dma.vmem_to_hbm [thread:$0]  %s270, 32, %s4, [#allocation6]
    $region41: #{tpu_custom_call.1} parent=1 // pred_fallthru
      _
    // Predicated region
    $region42: #{tpu_custom_call.1} parent=1 // pred_check
      _
    $region43: #{tpu_custom_call.1} parent=1 // pred_check_branch
      %274 = sbr.rel (0) target = $region45
    $region44: #{tpu_custom_call.1} parent=1 // pred_region
      %275 = dma.done [#allocation6], 32
    $region45: #{tpu_custom_call.1} parent=1 // pred_fallthru
      _
    %276 = vsyncpa [#allocation5], 1
    %277 = vsyncpa [#allocation8], 1
    %278 = vsyncpa [#allocation6], 1

</llo_original>
